<compile_context>
chip_gen: v5e
topology: v5e:2x2
jax: 0.10.0
libtpu: 0.0.40
codegen_flags: <defaults>
</compile_context>

<pallas_src>
import functools

import jax
import jax.numpy as jnp
from jax.experimental import pallas as pl
from jax.experimental.pallas import tpu as pltpu

_LANE = 128            # TPU lane width
_TN_MAX = 131072       # max tile along the sample axis (multiple of 128)


def _round_up(x, m):
    return (x + m - 1) // m * m


def _ce_partial_kernel(n_valid, tn, logits_ref, labels_ref, psum_ref):
    """Partial sum of per-sample softmax cross-entropy for one tile.

    logits_ref: (C, TN) logits tile in VMEM (samples on the lane axis).
    labels_ref: (1, TN) integer class ids in VMEM (native dtype, widened here).
    psum_ref:   (1, 128) f32 output block; the tile's CE sum broadcast over lanes.
    """
    logits = logits_ref[...].astype(jnp.float32)            # (C, TN)
    labels = labels_ref[...].astype(jnp.int32)              # (1, TN)

    # Numerically stable log-sum-exp over the class (sublane) axis.
    m = jnp.max(logits, axis=0, keepdims=True)                               # (1, TN)
    lse = m + jnp.log(jnp.sum(jnp.exp(logits - m), axis=0, keepdims=True))   # (1, TN)

    # Target logit: tiny (C,1) class iota broadcast against (1,TN) labels
    # (no full-size (C,TN) iota materialized).
    cls = jax.lax.broadcasted_iota(jnp.int32, (logits.shape[0], 1), 0)       # (C, 1)
    tgt = jnp.sum(jnp.where(cls == labels, logits, 0.0), axis=0, keepdims=True)

    ce = lse - tgt                                                           # (1, TN)

    # Mask ragged columns of the last tile (global sample idx >= n_valid).
    # jnp.where is a select, so garbage (even NaN/Inf) never propagates.
    col = jax.lax.broadcasted_iota(jnp.int32, ce.shape, 1) + pl.program_id(0) * tn
    ce = jnp.where(col < n_valid, ce, 0.0)

    # Lane-broadcast partial sum -> one unmasked lane-width store per tile.
    psum_ref[...] = jnp.broadcast_to(jnp.sum(ce, axis=1, keepdims=True), (1, _LANE))


@functools.partial(jax.jit, static_argnames=("alpha", "gamma", "num_classes"))
def focal_loss(prediction, annotation, alpha=0.25, gamma=2, num_classes=4):
    """prediction: (N, C) float logits ; annotation: (N,) integer class ids."""
    N, C = prediction.shape
    assert C == num_classes

    # Lane-dense layout plumbing.  The transpose is eligible for input fusion into
    # the Pallas DMA (allow_input_fusion below); labels reshape is free.
    logits_t = jnp.transpose(prediction, (1, 0))             # (C, N)
    labels = annotation.reshape(1, N)                        # (1, N), native int dtype

    # Tile the sample axis (multiple of 128).  Prefer >=2 tiles when N allows so
    # v7x's two TensorCores can split the "parallel" axis; the ragged last tile is
    # masked in-kernel, so no explicit padding is needed.
    if N > _LANE:
        tn = min(_TN_MAX, _round_up(pl.cdiv(N, 2), _LANE))
    else:
        tn = _LANE
    num_tiles = pl.cdiv(N, tn)

    partials = pl.pallas_call(
        functools.partial(_ce_partial_kernel, N, tn),
        out_shape=jax.ShapeDtypeStruct((1, num_tiles * _LANE), jnp.float32),
        grid=(num_tiles,),
        in_specs=[
            pl.BlockSpec((C, tn), lambda i: (0, i)),   # logits tile
            pl.BlockSpec((1, tn), lambda i: (0, i)),   # labels tile
        ],
        out_specs=pl.BlockSpec((1, _LANE), lambda i: (0, i)),
        compiler_params=pltpu.CompilerParams(
            dimension_semantics=("parallel",),
            allow_input_fusion=[True, True],
            vmem_limit_bytes=32 * 1024 * 1024,
        ),
    )(logits_t, labels)

    # Scalar epilogue in plain JAX (same jit; exact for arbitrary alpha / gamma).
    ce = jnp.sum(partials.reshape(num_tiles, _LANE)[:, 0]) / jnp.float32(N)
    pt = jnp.exp(-ce)
    return alpha * (1.0 - pt) ** gamma * ce


def _focal_loss_ref(prediction, annotation, alpha=0.25, gamma=2):
    # Pure-JAX reference mirroring torch.nn.CrossEntropyLoss + focal transform.
    logp = jax.nn.log_softmax(prediction.astype(jnp.float32), axis=-1)
    ce_rows = -jnp.take_along_axis(
        logp, annotation[:, None].astype(jnp.int32), axis=-1
    )[:, 0]
    ce = jnp.mean(ce_rows)
    pt = jnp.exp(-ce)
    return alpha * (1.0 - pt) ** gamma * ce


if __name__ == "__main__":
    key = jax.random.PRNGKey(0)
    k1, k2, k3, k4 = jax.random.split(key, 4)

    # Small case (module default numClasses=4): batch of 8 points.
    N, C = 8, 4
    prediction = jax.random.normal(k1, (N, C), dtype=jnp.float32)
    annotation = jax.random.randint(k2, (N,), 0, C, dtype=jnp.int32)

    out = jax.block_until_ready(focal_loss(prediction, annotation))
    ref = _focal_loss_ref(prediction, annotation)
    assert jnp.allclose(out, ref, rtol=1e-5, atol=1e-6), (out, ref)

    # Second case exercising the ragged-last-tile mask path (N not a multiple of 128,
    # and >=2 grid tiles).
    N2 = 300
    prediction2 = jax.random.normal(k3, (N2, C), dtype=jnp.float32)
    annotation2 = jax.random.randint(k4, (N2,), 0, C, dtype=jnp.int32)

    out2 = jax.block_until_ready(focal_loss(prediction2, annotation2))
    ref2 = _focal_loss_ref(prediction2, annotation2)
    assert jnp.allclose(out2, ref2, rtol=1e-5, atol=1e-6), (out2, ref2)

    print("KERNEL_OK")
</pallas_src>

<mosaic_0001>
module attributes {stable_mosaic.version = 11 : i64} {
  func.func @_ce_partial_kernel(%arg0: i32, %arg1: memref<4x128xf32, #tpu.memory_space<vmem>>, %arg2: memref<1x128xi32, #tpu.memory_space<vmem>>, %arg3: memref<1x128xf32, #tpu.memory_space<vmem>>) attributes {dimension_semantics = [#tpu.dimension_semantics<parallel>], iteration_bounds = array<i64: 1>, scalar_prefetch = 0 : i64, scratch_operands = 0 : i64, tpu.core_type = #tpu.core_type<tc>, window_params = [{transform_indices = @transform_0, window_bounds = array<i64: 4, 128>}, {transform_indices = @transform_1, window_bounds = array<i64: 1, 128>}, {transform_indices = @transform_2, window_bounds = array<i64: 1, 128>}]} {
    %c0 = arith.constant 0 : index
    %c0_0 = arith.constant 0 : index
    %0 = vector.load %arg1[%c0, %c0_0] : memref<4x128xf32, #tpu.memory_space<vmem>>, vector<4x128xf32>
    %c0_1 = arith.constant 0 : index
    %c0_2 = arith.constant 0 : index
    %1 = vector.load %arg2[%c0_1, %c0_2] : memref<1x128xi32, #tpu.memory_space<vmem>>, vector<1x128xi32>
    %cst = arith.constant dense<0xFF800000> : vector<128xf32>
    %2 = vector.multi_reduction <maximumf>, %0, %cst [0] : vector<4x128xf32> to vector<128xf32>
    %3 = vector.shape_cast %2 : vector<128xf32> to vector<1x128xf32>
    %4 = vector.broadcast %3 : vector<1x128xf32> to vector<4x128xf32>
    %5 = arith.subf %0, %4 : vector<4x128xf32>
    %6 = math.exp %5 : vector<4x128xf32>
    %cst_3 = arith.constant dense<0.000000e+00> : vector<128xf32>
    %7 = vector.multi_reduction <add>, %6, %cst_3 [0] : vector<4x128xf32> to vector<128xf32>
    %8 = vector.shape_cast %7 : vector<128xf32> to vector<1x128xf32>
    %9 = math.log %8 : vector<1x128xf32>
    %10 = arith.addf %3, %9 : vector<1x128xf32>
    %11 = tpu.iota {dimensions = array<i32: 0>} : vector<4x1xi32>
    %12 = vector.broadcast %11 : vector<4x1xi32> to vector<4x128xi32>
    %13 = vector.broadcast %1 : vector<1x128xi32> to vector<4x128xi32>
    %14 = arith.cmpi eq, %12, %13 : vector<4x128xi32>
    %cst_4 = arith.constant 0.000000e+00 : f32
    %15 = vector.broadcast %cst_4 : f32 to vector<4x128xf32>
    %16 = arith.select %14, %0, %15 : vector<4x128xi1>, vector<4x128xf32>
    %cst_5 = arith.constant dense<0.000000e+00> : vector<128xf32>
    %17 = vector.multi_reduction <add>, %16, %cst_5 [0] : vector<4x128xf32> to vector<128xf32>
    %18 = vector.shape_cast %17 : vector<128xf32> to vector<1x128xf32>
    %19 = arith.subf %10, %18 : vector<1x128xf32>
    %20 = tpu.iota {dimensions = array<i32: 1>} : vector<1x128xi32>
    %c128_i32 = arith.constant 128 : i32
    %21 = arith.muli %arg0, %c128_i32 : i32
    %22 = vector.broadcast %21 : i32 to vector<1x128xi32>
    %23 = arith.addi %20, %22 : vector<1x128xi32>
    %c8_i32 = arith.constant 8 : i32
    %24 = vector.broadcast %c8_i32 : i32 to vector<1x128xi32>
    %25 = arith.cmpi slt, %23, %24 : vector<1x128xi32>
    %cst_6 = arith.constant 0.000000e+00 : f32
    %26 = vector.broadcast %cst_6 : f32 to vector<1x128xf32>
    %27 = arith.select %25, %19, %26 : vector<1x128xi1>, vector<1x128xf32>
    %cst_7 = arith.constant dense<0.000000e+00> : vector<1xf32>
    %28 = vector.multi_reduction <add>, %27, %cst_7 [1] : vector<1x128xf32> to vector<1xf32>
    %29 = vector.shape_cast %28 : vector<1xf32> to vector<1x1xf32>
    %30 = vector.shape_cast %29 : vector<1x1xf32> to vector<1x1xf32>
    %31 = vector.broadcast %30 : vector<1x1xf32> to vector<1x128xf32>
    %c0_8 = arith.constant 0 : index
    %c0_9 = arith.constant 0 : index
    %32 = vector.load %arg3[%c0_8, %c0_9] : memref<1x128xf32, #tpu.memory_space<vmem>>, vector<1x128xf32>
    tpu.vector_store %arg3[%c0_8, %c0_9], %31 {strides = array<i32>} : memref<1x128xf32, #tpu.memory_space<vmem>>, vector<1x128xf32>,
    return
  }
  func.func @transform_0(%arg0: i32) -> (i32, i32) {
    %c0_i32 = arith.constant 0 : i32
    %c0_i32_0 = arith.constant 0 : i32
    return %c0_i32, %arg0 : i32, i32
  }
  func.func @transform_1(%arg0: i32) -> (i32, i32) {
    %c0_i32 = arith.constant 0 : i32
    %c0_i32_0 = arith.constant 0 : i32
    return %c0_i32, %arg0 : i32, i32
  }
  func.func @transform_2(%arg0: i32) -> (i32, i32) {
    %c0_i32 = arith.constant 0 : i32
    %c0_i32_0 = arith.constant 0 : i32
    return %c0_i32, %arg0 : i32, i32
  }
}

</mosaic_0001>

<llo_original>
// kernel: focal_loss.2
$region0: #{focal_loss.2}
  #allocation0 [shape = 'u32[]', space=smem, size = 0x4, offset = 0x4, fixed_abs, tag = 'smem constant byte address 0x4 - core index']
  #allocation1 [shape = 'u32[72,128]{1,0:T(1,128)}', space=vmem, size = 0x9000, scoped, tag = 'internal scratch']
  %s0 = inlined_call_operand.vmem [shape: f32[8,4], index: 0, kind: input, shape index: {}]
  %s1 = inlined_call_operand.hbm [shape: s32[8], index: 1, kind: input, shape index: {}]
  %s2 = inlined_call_operand.vmem [shape: f32[1,128], index: 2, kind: output, shape index: {}]
  %s3 = sld [smem:[#allocation0]]
  $region22: #{focal_loss.2} parent=0
    _
  %s5 = ssub.s32 1, %s3
  %s6 = scalar_select 0, %s5, %s3
  $region1: #{focal_loss.2} parent=0
    #allocation2 [shape = 'u8[512]{0}', space=vmem, size = 0x400, scoped, tag = 'operand span for operand 1']
    #allocation3 [shape = 's32[1]{0}', space=sflag, size = 0x4, scoped, tag = 'scoped memory for focal_loss.2']
    #allocation4 [shape = 'u8[2048]{0}', space=vmem, size = 0x800, dematerialized = true, scoped, tag = 'FusionAdapter Buffer %fusion.1 = f32[4,8]{1,0:T(4,128)} fusion(%param_0.3), kind=kLoop, calls=%fused_computation.1.clone, metadata={op_name="jit(focal_loss)/transpose" stack_frame_id=8}']
    #allocation5 [shape = 'u8[512]{0}', space=vmem, size = 0x400, dematerialized = true, scoped, tag = 'FusionAdapter Buffer %fusion.2 = s32[1,8]{1,0:T(1,128)} fusion(%param_1.2), kind=kLoop, calls=%fused_computation.2.clone, metadata={op_name="jit(focal_loss)/reshape" stack_frame_id=9}']
    %7 = vsyncpa [#allocation3], 0
    // Predicated region
    $region2: #{focal_loss.2} parent=1 // pred_check
      _
    $region3: #{focal_loss.2} parent=1 // pred_check_branch
      %9 = sbr.rel (0) target = $region5
    $region4: #{focal_loss.2} parent=1 // pred_region
      _
    $region5: #{focal_loss.2} parent=1 // pred_fallthru
      _
    // Predicated region
    $region6: #{focal_loss.2} parent=1 // pred_check
      _
    $region7: #{focal_loss.2} parent=1 // pred_check_branch
      %11 = sbr.rel (0) target = $region9
    $region8: #{focal_loss.2} parent=1 // pred_region
      %13 = vsyncadd [#allocation3], 0
      %s15 = sshll.u32 %s1, 4
      %s16 = int_to_ptr.hbm [resolvable:$true] %s15
      %s17 = sshll.u32 [#allocation2], 4
      %s18 = int_to_ptr.vmem [resolvable:$true] %s17
      %20 = dma.hbm_to_vmem [thread:$0]  %s16, 16, %s18, [#allocation3]
    $region9: #{focal_loss.2} parent=1 // pred_fallthru
      _
    // Predicated region
    $region10: #{focal_loss.2} parent=1 // pred_check
      _
    $region11: #{focal_loss.2} parent=1 // pred_check_branch
      %22 = sbr.rel (0) target = $region13
    $region12: #{focal_loss.2} parent=1 // pred_region
      %24 = dma.done [#allocation3], 16
    $region13: #{focal_loss.2} parent=1 // pred_fallthru
      _
    %v25 = vld [vmem:[%s0] sm:$0xf]
    %s27 = ssub.s32 16, 1
    %28 = vst [vmem:[#allocation4] sm:%s27] %v25
    %v29 = vld [vmem:[#allocation2] sm:$0x1]
    %s31 = ssub.s32 2, 1
    %32 = vst [vmem:[#allocation5] sm:%s31] %v29
    %v33 = vld [vmem:[#allocation4] sm:$0xf]
    %v34 = vld [vmem:[#allocation5] sm:$0x1]
    %vm35 = vcmask 1043456
    %v36 = vsel %vm35, %v33, -inf
    %v37 = vrot.slane %v36, 4
    %v38 = vmax.f32 %v36, %v37
    %v39 = vrot.slane %v38, 2
    %v40 = vmax.f32 %v38, %v39
    %v41 = vrot.slane %v40, 1
    %v42 = vmax.f32 %v40, %v41
    %v43 = vsub.f32 %v33, %v42
    %v44 = vmul.f32 %v43, 1.442695
    %v45 = vpow.pop %v44
    %v46 = vsel %vm35, %v45, 0.0
    %v47 = vrot.slane %v46, 4
    %v48 = vadd.f32 %v46, %v47
    %v49 = vrot.slane %v48, 2
    %v50 = vadd.f32 %v48, %v49
    %v51 = vrot.slane %v50, 1
    %v52 = vadd.f32 %v50, %v51
    %v53 = vlog2.pop %v52
    %v54 = vmul.f32 %v53, 0.6931472
    %v55 = vadd.f32 %v42, %v54
    %v56 = vlaneseq
    %v57 = vshrl.u32 %v56, 7
    %v58 = vperm.slane %v34, 0
    %vm59 = vcmp.eq.s32.totalorder %v57, %v58
    %v60 = vsel %vm59, %v33, 0.0
    %v61 = vsel %vm35, %v60, 0.0
    %v62 = vrot.slane %v61, 4
    %v63 = vadd.f32 %v61, %v62
    %v64 = vrot.slane %v63, 2
    %v65 = vadd.f32 %v63, %v64
    %v66 = vrot.slane %v65, 1
    %v67 = vadd.f32 %v65, %v66
    %v68 = vsub.f32 %v55, %v67
    %v69 = vlaneseq
    %v70 = vand.u32 %v69, 127
    %s71 = smul.u32 0, 128
    %v72 = vstv %s71
    %v73 = vadd.s32 %v70, %v72
    %vm74 = vcmp.lt.s32.totalorder %v73, 8
    %v75 = vsel %vm74, %v68, 0.0
    %76 = vadd.xlane.f32.xlu0 %v75
    %v77 = vpop.xlane.xlu0 %76
    %78 = vst [vmem:[%s2] sm:$0x1] %v77
    // Predicated region
    $region14: #{focal_loss.2} parent=1 // pred_check
      _
    $region15: #{focal_loss.2} parent=1 // pred_check_branch
      %80 = sbr.rel (0) target = $region17
    $region16: #{focal_loss.2} parent=1 // pred_region
      _
    $region17: #{focal_loss.2} parent=1 // pred_fallthru
      _
    // Predicated region
    $region18: #{focal_loss.2} parent=1 // pred_check
      _
    $region19: #{focal_loss.2} parent=1 // pred_check_branch
      %82 = sbr.rel (0) target = $region21
    $region20: #{focal_loss.2} parent=1 // pred_region
      _
    $region21: #{focal_loss.2} parent=1 // pred_fallthru
      _
    %83 = vsyncpa [#allocation3], 1

</llo_original>
